<compile_context>
chip_gen: v7x
topology: tpu7x:2x2x1
jax: 0.10.0
libtpu: 0.0.40
codegen_flags: <defaults>
</compile_context>

<pallas_src>
import jax
import jax.numpy as jnp
from jax.experimental import pallas as pl
from jax.experimental.pallas import tpu as pltpu

STATE_DIM = 2 + 4            # 6
ACTION_DIM = 1
IN_DIM = STATE_DIM + ACTION_DIM   # 7
F_PAD = 8                    # packed feature count (sublane aligned)
HIDDEN_DIM = 128


def _round_up(x, m):
    return (x + m - 1) // m * m


def critic_kernel(xt_ref, w1t_ref, b1t_ref, w2t_ref, b2t_ref, w3c_ref, b3_ref,
                  out_ref):
    xt = xt_ref[...]                     # (F_PAD, TM) f32, batch on lanes
    w1t = w1t_ref[...]                   # (H, F_PAD)  f32

    # --- Layer 1: Linear(7 -> H) + ReLU, computed OFF the MXU. ---
    # h1t[h, b] = b1[h] + sum_k w1[k, h] * x[b, k]
    # 7-term unrolled broadcast-FMA: (H,1) lane-broadcast * (1,TM) sublane-
    # broadcast per term -> pure VPU/XLU work, frees the MXU for layer 2.
    h1t = b1t_ref[...] + w1t[:, 0:1] * xt[0:1, :]
    for k in range(1, IN_DIM):
        h1t = h1t + w1t[:, k:k + 1] * xt[k:k + 1, :]
    h1t = jnp.maximum(h1t, 0.0)          # (H, TM) f32

    # --- Layer 2: Linear(H -> H) + ReLU on the MXU, bf16 operands, f32 acc.
    h2t = jnp.dot(w2t_ref[...], h1t.astype(jnp.bfloat16),
                  preferred_element_type=jnp.float32)
    h2t = jnp.maximum(h2t + b2t_ref[...], 0.0)   # (H, TM) f32

    # --- Layer 3: Linear(H -> 1) as a VPU multiply + sublane reduction. ---
    # Batch stays on the lane axis -> lane-dense (1, TM) store, no transpose.
    out = jnp.sum(h2t * w3c_ref[...], axis=0, keepdims=True)   # (1, TM) f32
    out_ref[...] = out + b3_ref[0, 0]


def critic_forward(state, action, params, *, block_batch=2048):
    """state: (B, STATE_DIM), action: (B, 1) -> value: (B, 1)."""
    w1, b1, w2, b2, w3, b3 = params
    state = state.astype(jnp.float32)
    action = action.astype(jnp.float32)

    B = state.shape[0]
    H = w2.shape[0]

    # Batch tile (lane axis): multiple of 128; at least 2 grid steps when the
    # batch allows it (v7x megacore), capped at block_batch (2048 default
    # keeps VMEM comfortably inside v5e's 16 MiB scoped default).
    if B <= 128:
        tm = 128
    else:
        tm = min(block_batch, _round_up(-(-B // 2), 128))
    bp = _round_up(B, tm)

    # Pack state+action into one (B, 8) slab (6 state cols, action, zero pad)
    # and transpose so batch lives on the lane axis for the whole kernel.
    x = jnp.concatenate([state, action], axis=1)           # (B, 7)
    x = jnp.pad(x, ((0, bp - B), (0, F_PAD - IN_DIM)))      # (bp, 8)
    xt = x.T                                                # (8, bp) f32

    w1t = jnp.pad(w1, ((0, F_PAD - IN_DIM), (0, 0))).T      # (H, 8)  f32
    b1t = b1.reshape(H, 1)                                  # (H, 1)  f32
    w2t = w2.T.astype(jnp.bfloat16)                         # (H, H)  bf16
    b2t = b2.reshape(H, 1)                                  # (H, 1)  f32
    w3c = w3.reshape(H, 1)                                  # (H, 1)  f32
    b3s = b3.reshape(1, 1)                                  # (1, 1)  f32

    const = lambda shape: pl.BlockSpec(shape, lambda i: (0, 0))

    out_row = pl.pallas_call(
        critic_kernel,
        out_shape=jax.ShapeDtypeStruct((1, bp), jnp.float32),
        grid=(bp // tm,),
        in_specs=[
            pl.BlockSpec((F_PAD, tm), lambda i: (0, i)),   # x^T tile (streamed)
            const((H, F_PAD)),                             # W1^T (resident)
            const((H, 1)),                                 # b1
            const((H, H)),                                 # W2^T (bf16, resident)
            const((H, 1)),                                 # b2
            const((H, 1)),                                 # w3 column
            pl.BlockSpec(memory_space=pltpu.MemorySpace.SMEM),  # b3 scalar
        ],
        out_specs=pl.BlockSpec((1, tm), lambda i: (0, i)),
        compiler_params=pltpu.CompilerParams(
            dimension_semantics=("parallel",)),
    )(xt, w1t, b1t, w2t, b2t, w3c, b3s)

    return out_row.reshape(bp, 1)[:B]


def init_params(key, state_dim=STATE_DIM, hidden_dim=HIDDEN_DIM):
    """Deterministic init mirroring PyTorch Linear default (uniform +/- 1/sqrt(fan_in))."""
    in_dim = state_dim + 1
    keys = jax.random.split(key, 6)

    def lin(kw, kb, fan_in, fan_out):
        bound = 1.0 / jnp.sqrt(jnp.float32(fan_in))
        w = jax.random.uniform(kw, (fan_in, fan_out), jnp.float32, -bound, bound)
        b = jax.random.uniform(kb, (1, fan_out), jnp.float32, -bound, bound)
        return w, b

    w1, b1 = lin(keys[0], keys[1], in_dim, hidden_dim)
    w2, b2 = lin(keys[2], keys[3], hidden_dim, hidden_dim)
    w3, b3 = lin(keys[4], keys[5], hidden_dim, 1)
    return (w1, b1, w2, b2, w3, b3)


def critic_reference(state, action, params):
    """Plain-JAX f32 reference (matches the PyTorch module semantics)."""
    w1, b1, w2, b2, w3, b3 = params
    x = jnp.concatenate([state, action], axis=1)
    h1 = jnp.maximum(x @ w1 + b1, 0.0)
    h2 = jnp.maximum(h1 @ w2 + b2, 0.0)
    return h2 @ w3 + b3


if __name__ == "__main__":
    key = jax.random.PRNGKey(0)
    k_params, k_state, k_action = jax.random.split(key, 3)
    params = init_params(k_params)

    # Small check (single grid step; batch padded 8 -> 128).
    B = 8
    state = jax.random.normal(k_state, (B, STATE_DIM), jnp.float32)
    action = jax.random.normal(k_action, (B, ACTION_DIM), jnp.float32)
    out = jax.block_until_ready(critic_forward(state, action, params))
    ref = critic_reference(state, action, params)
    assert out.shape == (B, 1), out.shape
    # bf16 MXU operands (f32 accumulation) -> loosened tolerance vs f32 ref.
    assert jnp.allclose(out, ref, atol=3e-2, rtol=3e-2), (out, ref)

    # Multi-step grid + ragged batch (exercises tiling, padding, pipelining
    # and the >=2-step "parallel" path v7x megacore uses).
    B2 = 300
    state2 = jax.random.normal(jax.random.PRNGKey(1), (B2, STATE_DIM), jnp.float32)
    action2 = jax.random.normal(jax.random.PRNGKey(2), (B2, ACTION_DIM), jnp.float32)
    out2 = jax.block_until_ready(
        critic_forward(state2, action2, params, block_batch=128))
    ref2 = critic_reference(state2, action2, params)
    assert out2.shape == (B2, 1), out2.shape
    assert jnp.allclose(out2, ref2, atol=3e-2, rtol=3e-2), (out2, ref2)

    print("KERNEL_OK")
</pallas_src>

<mosaic_0001>
module attributes {stable_mosaic.version = 11 : i64} {
  func.func @critic_kernel(%arg0: i32, %arg1: memref<8x128xf32, #tpu.memory_space<vmem>>, %arg2: memref<128x8xf32, #tpu.memory_space<vmem>>, %arg3: memref<128x1xf32, #tpu.memory_space<vmem>>, %arg4: memref<128x128xbf16, #tpu.memory_space<vmem>>, %arg5: memref<128x1xf32, #tpu.memory_space<vmem>>, %arg6: memref<128x1xf32, #tpu.memory_space<vmem>>, %arg7: memref<1x1xf32, #tpu.memory_space<smem>>, %arg8: memref<1x128xf32, #tpu.memory_space<vmem>>) attributes {dimension_semantics = [#tpu.dimension_semantics<parallel>], iteration_bounds = array<i64: 1>, scalar_prefetch = 0 : i64, scratch_operands = 0 : i64, tpu.core_type = #tpu.core_type<tc>, window_params = [{transform_indices = @transform_0, window_bounds = array<i64: 8, 128>}, {pipeline_mode = #tpu.pipeline_mode<synchronous>, transform_indices = @transform_1, window_bounds = array<i64: 128, 8>}, {pipeline_mode = #tpu.pipeline_mode<synchronous>, transform_indices = @transform_2, window_bounds = array<i64: 128, 1>}, {pipeline_mode = #tpu.pipeline_mode<synchronous>, transform_indices = @transform_3, window_bounds = array<i64: 128, 128>}, {pipeline_mode = #tpu.pipeline_mode<synchronous>, transform_indices = @transform_4, window_bounds = array<i64: 128, 1>}, {pipeline_mode = #tpu.pipeline_mode<synchronous>, transform_indices = @transform_5, window_bounds = array<i64: 128, 1>}, {transform_indices = @transform_6, window_bounds = array<i64: 1, 1>}, {transform_indices = @transform_7, window_bounds = array<i64: 1, 128>}]} {
    %c0 = arith.constant 0 : index
    %c0_0 = arith.constant 0 : index
    %0 = vector.load %arg1[%c0, %c0_0] : memref<8x128xf32, #tpu.memory_space<vmem>>, vector<8x128xf32>
    %c0_1 = arith.constant 0 : index
    %c0_2 = arith.constant 0 : index
    %1 = vector.load %arg2[%c0_1, %c0_2] : memref<128x8xf32, #tpu.memory_space<vmem>>, vector<128x8xf32>
    %c0_3 = arith.constant 0 : index
    %c0_4 = arith.constant 0 : index
    %2 = vector.load %arg3[%c0_3, %c0_4] : memref<128x1xf32, #tpu.memory_space<vmem>>, vector<128x1xf32>
    %3 = vector.extract_strided_slice %1 {offsets = [0, 0], sizes = [128, 1], strides = [1, 1]} : vector<128x8xf32> to vector<128x1xf32>
    %4 = vector.extract_strided_slice %0 {offsets = [0, 0], sizes = [1, 128], strides = [1, 1]} : vector<8x128xf32> to vector<1x128xf32>
    %5 = vector.broadcast %3 : vector<128x1xf32> to vector<128x128xf32>
    %6 = vector.broadcast %4 : vector<1x128xf32> to vector<128x128xf32>
    %7 = arith.mulf %5, %6 : vector<128x128xf32>
    %8 = vector.broadcast %2 : vector<128x1xf32> to vector<128x128xf32>
    %9 = arith.addf %8, %7 : vector<128x128xf32>
    %10 = vector.extract_strided_slice %1 {offsets = [0, 1], sizes = [128, 1], strides = [1, 1]} : vector<128x8xf32> to vector<128x1xf32>
    %11 = vector.extract_strided_slice %0 {offsets = [1, 0], sizes = [1, 128], strides = [1, 1]} : vector<8x128xf32> to vector<1x128xf32>
    %12 = vector.broadcast %10 : vector<128x1xf32> to vector<128x128xf32>
    %13 = vector.broadcast %11 : vector<1x128xf32> to vector<128x128xf32>
    %14 = arith.mulf %12, %13 : vector<128x128xf32>
    %15 = arith.addf %9, %14 : vector<128x128xf32>
    %16 = vector.extract_strided_slice %1 {offsets = [0, 2], sizes = [128, 1], strides = [1, 1]} : vector<128x8xf32> to vector<128x1xf32>
    %17 = vector.extract_strided_slice %0 {offsets = [2, 0], sizes = [1, 128], strides = [1, 1]} : vector<8x128xf32> to vector<1x128xf32>
    %18 = vector.broadcast %16 : vector<128x1xf32> to vector<128x128xf32>
    %19 = vector.broadcast %17 : vector<1x128xf32> to vector<128x128xf32>
    %20 = arith.mulf %18, %19 : vector<128x128xf32>
    %21 = arith.addf %15, %20 : vector<128x128xf32>
    %22 = vector.extract_strided_slice %1 {offsets = [0, 3], sizes = [128, 1], strides = [1, 1]} : vector<128x8xf32> to vector<128x1xf32>
    %23 = vector.extract_strided_slice %0 {offsets = [3, 0], sizes = [1, 128], strides = [1, 1]} : vector<8x128xf32> to vector<1x128xf32>
    %24 = vector.broadcast %22 : vector<128x1xf32> to vector<128x128xf32>
    %25 = vector.broadcast %23 : vector<1x128xf32> to vector<128x128xf32>
    %26 = arith.mulf %24, %25 : vector<128x128xf32>
    %27 = arith.addf %21, %26 : vector<128x128xf32>
    %28 = vector.extract_strided_slice %1 {offsets = [0, 4], sizes = [128, 1], strides = [1, 1]} : vector<128x8xf32> to vector<128x1xf32>
    %29 = vector.extract_strided_slice %0 {offsets = [4, 0], sizes = [1, 128], strides = [1, 1]} : vector<8x128xf32> to vector<1x128xf32>
    %30 = vector.broadcast %28 : vector<128x1xf32> to vector<128x128xf32>
    %31 = vector.broadcast %29 : vector<1x128xf32> to vector<128x128xf32>
    %32 = arith.mulf %30, %31 : vector<128x128xf32>
    %33 = arith.addf %27, %32 : vector<128x128xf32>
    %34 = vector.extract_strided_slice %1 {offsets = [0, 5], sizes = [128, 1], strides = [1, 1]} : vector<128x8xf32> to vector<128x1xf32>
    %35 = vector.extract_strided_slice %0 {offsets = [5, 0], sizes = [1, 128], strides = [1, 1]} : vector<8x128xf32> to vector<1x128xf32>
    %36 = vector.broadcast %34 : vector<128x1xf32> to vector<128x128xf32>
    %37 = vector.broadcast %35 : vector<1x128xf32> to vector<128x128xf32>
    %38 = arith.mulf %36, %37 : vector<128x128xf32>
    %39 = arith.addf %33, %38 : vector<128x128xf32>
    %40 = vector.extract_strided_slice %1 {offsets = [0, 6], sizes = [128, 1], strides = [1, 1]} : vector<128x8xf32> to vector<128x1xf32>
    %41 = vector.extract_strided_slice %0 {offsets = [6, 0], sizes = [1, 128], strides = [1, 1]} : vector<8x128xf32> to vector<1x128xf32>
    %42 = vector.broadcast %40 : vector<128x1xf32> to vector<128x128xf32>
    %43 = vector.broadcast %41 : vector<1x128xf32> to vector<128x128xf32>
    %44 = arith.mulf %42, %43 : vector<128x128xf32>
    %45 = arith.addf %39, %44 : vector<128x128xf32>
    %cst = arith.constant 0.000000e+00 : f32
    %46 = vector.broadcast %cst : f32 to vector<128x128xf32>
    %47 = arith.maximumf %45, %46 : vector<128x128xf32>
    %c0_5 = arith.constant 0 : index
    %c0_6 = arith.constant 0 : index
    %48 = vector.load %arg4[%c0_5, %c0_6] : memref<128x128xbf16, #tpu.memory_space<vmem>>, vector<128x128xbf16>
    %49 = arith.truncf %47 : vector<128x128xf32> to vector<128x128xbf16>
    %cst_7 = arith.constant dense<0.000000e+00> : vector<128x128xf32>
    %50 = tpu.matmul %48, %49, %cst_7 {dimension_numbers = #tpu.dot_dimension_numbers<[1], [0], [0], [1], [0, 0, 1, 1], [], []>} : vector<128x128xbf16>, vector<128x128xbf16>, vector<128x128xf32> -> vector<128x128xf32>
    %c0_8 = arith.constant 0 : index
    %c0_9 = arith.constant 0 : index
    %51 = vector.load %arg5[%c0_8, %c0_9] : memref<128x1xf32, #tpu.memory_space<vmem>>, vector<128x1xf32>
    %52 = vector.broadcast %51 : vector<128x1xf32> to vector<128x128xf32>
    %53 = arith.addf %50, %52 : vector<128x128xf32>
    %cst_10 = arith.constant 0.000000e+00 : f32
    %54 = vector.broadcast %cst_10 : f32 to vector<128x128xf32>
    %55 = arith.maximumf %53, %54 : vector<128x128xf32>
    %c0_11 = arith.constant 0 : index
    %c0_12 = arith.constant 0 : index
    %56 = vector.load %arg6[%c0_11, %c0_12] : memref<128x1xf32, #tpu.memory_space<vmem>>, vector<128x1xf32>
    %57 = vector.broadcast %56 : vector<128x1xf32> to vector<128x128xf32>
    %58 = arith.mulf %55, %57 : vector<128x128xf32>
    %cst_13 = arith.constant dense<0.000000e+00> : vector<128xf32>
    %59 = vector.multi_reduction <add>, %58, %cst_13 [0] : vector<128x128xf32> to vector<128xf32>
    %60 = vector.shape_cast %59 : vector<128xf32> to vector<1x128xf32>
    %c0_14 = arith.constant 0 : index
    %c0_15 = arith.constant 0 : index
    %61 = memref.load %arg7[%c0_14, %c0_15] : memref<1x1xf32, #tpu.memory_space<smem>>
    %62 = vector.broadcast %61 : f32 to vector<1x128xf32>
    %63 = arith.addf %60, %62 : vector<1x128xf32>
    %c0_16 = arith.constant 0 : index
    %c0_17 = arith.constant 0 : index
    %64 = vector.load %arg8[%c0_16, %c0_17] : memref<1x128xf32, #tpu.memory_space<vmem>>, vector<1x128xf32>
    tpu.vector_store %arg8[%c0_16, %c0_17], %63 {strides = array<i32>} : memref<1x128xf32, #tpu.memory_space<vmem>>, vector<1x128xf32>,
    return
  }
  func.func @transform_0(%arg0: i32) -> (i32, i32) {
    %c0_i32 = arith.constant 0 : i32
    %c0_i32_0 = arith.constant 0 : i32
    return %c0_i32, %arg0 : i32, i32
  }
  func.func @transform_1(%arg0: i32) -> (i32, i32) {
    %c0_i32 = arith.constant 0 : i32
    %c0_i32_0 = arith.constant 0 : i32
    %c0_i32_1 = arith.constant 0 : i32
    return %c0_i32, %c0_i32_0 : i32, i32
  }
  func.func @transform_2(%arg0: i32) -> (i32, i32) {
    %c0_i32 = arith.constant 0 : i32
    %c0_i32_0 = arith.constant 0 : i32
    %c0_i32_1 = arith.constant 0 : i32
    return %c0_i32, %c0_i32_0 : i32, i32
  }
  func.func @transform_3(%arg0: i32) -> (i32, i32) {
    %c0_i32 = arith.constant 0 : i32
    %c0_i32_0 = arith.constant 0 : i32
    %c0_i32_1 = arith.constant 0 : i32
    return %c0_i32, %c0_i32_0 : i32, i32
  }
  func.func @transform_4(%arg0: i32) -> (i32, i32) {
    %c0_i32 = arith.constant 0 : i32
    %c0_i32_0 = arith.constant 0 : i32
    %c0_i32_1 = arith.constant 0 : i32
    return %c0_i32, %c0_i32_0 : i32, i32
  }
  func.func @transform_5(%arg0: i32) -> (i32, i32) {
    %c0_i32 = arith.constant 0 : i32
    %c0_i32_0 = arith.constant 0 : i32
    %c0_i32_1 = arith.constant 0 : i32
    return %c0_i32, %c0_i32_0 : i32, i32
  }
  func.func @transform_6(%arg0: i32) -> (i32, i32) {
    %c0_i32 = arith.constant 0 : i32
    %c0_i32_0 = arith.constant 0 : i32
    %c0_i32_1 = arith.constant 0 : i32
    return %c0_i32, %c0_i32_0 : i32, i32
  }
  func.func @transform_7(%arg0: i32) -> (i32, i32) {
    %c0_i32 = arith.constant 0 : i32
    %c0_i32_0 = arith.constant 0 : i32
    return %c0_i32, %arg0 : i32, i32
  }
}

</mosaic_0001>

<llo_original>
// kernel: tpu_custom_call.1
$region0: #{tpu_custom_call.1}
  #allocation0 [shape = 'u32[]', space=smem, size = 0x4, offset = 0x4, fixed_abs, tag = 'smem constant byte address 0x4 - core index']
  #allocation1 [shape = 'u32[144,128]{1,0:T(1,128)}', space=vmem, size = 0x12000, scoped, tag = 'internal scratch']
  #allocation2 [shape = 'f32[1,1]{1,0:T(1,128)S(6)}', space=smem, size = 0x200, scoped, tag = 'scoped memory for tpu_custom_call.1']
  %s0 = inlined_call_operand.vmem [shape: f32[8,128], index: 0, kind: input, shape index: {}]
  %s1 = inlined_call_operand.vmem [shape: f32[128,8], index: 1, kind: input, shape index: {}]
  %s2 = inlined_call_operand.vmem [shape: f32[128,1], index: 2, kind: input, shape index: {}]
  %s3 = inlined_call_operand.vmem [shape: bf16[128,128], index: 3, kind: input, shape index: {}]
  %s4 = inlined_call_operand.vmem [shape: f32[128,1], index: 4, kind: input, shape index: {}]
  %s5 = inlined_call_operand.vmem [shape: f32[128,1], index: 5, kind: input, shape index: {}]
  %s6 = inlined_call_operand.<no memory space> [shape: f32[1,1], index: 6, kind: input, shape index: {}]
  %s7 = inlined_call_operand.hbm [shape: f32[1,128], index: 7, kind: output, shape index: {}]
  %s8 = sld [smem:[#allocation0]]
  $region38: #{tpu_custom_call.1} parent=0
    _
  %s10 = ssub.s32 1, %s8
  %s11 = scalar_select 0, %s10, %s8
  %12 = sst [smem:[#allocation2]] %s6
  $region1: #{tpu_custom_call.1} parent=0
    #allocation3 [shape = 'u8[512]{0}', space=vmem, size = 0x400, scoped, tag = 'output window, operand 0, single buffered']
    #allocation4 [shape = 's32[1]{0}', space=sflag, size = 0x4, scoped, tag = 'scoped memory for tpu_custom_call.1']
    %13 = vsyncpa [#allocation4], 0
    // Predicated region
    $region2: #{tpu_custom_call.1} parent=1 // pred_check
      _
    $region3: #{tpu_custom_call.1} parent=1 // pred_check_branch
      %15 = sbr.rel (0) target = $region5
    $region4: #{tpu_custom_call.1} parent=1 // pred_region
      _
    $region5: #{tpu_custom_call.1} parent=1 // pred_fallthru
      _
    // Predicated region
    $region6: #{tpu_custom_call.1} parent=1 // pred_check
      _
    $region7: #{tpu_custom_call.1} parent=1 // pred_check_branch
      %17 = sbr.rel (0) target = $region9
    $region8: #{tpu_custom_call.1} parent=1 // pred_region
      _
    $region9: #{tpu_custom_call.1} parent=1 // pred_fallthru
      _
    // Predicated region
    $region10: #{tpu_custom_call.1} parent=1 // pred_check
      _
    $region11: #{tpu_custom_call.1} parent=1 // pred_check_branch
      %19 = sbr.rel (0) target = $region13
    $region12: #{tpu_custom_call.1} parent=1 // pred_region
      _
    $region13: #{tpu_custom_call.1} parent=1 // pred_fallthru
      _
    // Predicated region
    $region14: #{tpu_custom_call.1} parent=1 // pred_check
      _
    $region15: #{tpu_custom_call.1} parent=1 // pred_check_branch
      %21 = sbr.rel (0) target = $region17
    $region16: #{tpu_custom_call.1} parent=1 // pred_region
      _
    $region17: #{tpu_custom_call.1} parent=1 // pred_fallthru
      _
    // Predicated region
    $region18: #{tpu_custom_call.1} parent=1 // pred_check
      _
    $region19: #{tpu_custom_call.1} parent=1 // pred_check_branch
      %23 = sbr.rel (0) target = $region21
    $region20: #{tpu_custom_call.1} parent=1 // pred_region
      _
    $region21: #{tpu_custom_call.1} parent=1 // pred_fallthru
      _
    // Predicated region
    $region22: #{tpu_custom_call.1} parent=1 // pred_check
      _
    $region23: #{tpu_custom_call.1} parent=1 // pred_check_branch
      %25 = sbr.rel (0) target = $region25
    $region24: #{tpu_custom_call.1} parent=1 // pred_region
      _
    $region25: #{tpu_custom_call.1} parent=1 // pred_fallthru
      _
    // Predicated region
    $region26: #{tpu_custom_call.1} parent=1 // pred_check
      _
    $region27: #{tpu_custom_call.1} parent=1 // pred_check_branch
      %27 = sbr.rel (0) target = $region29
    $region28: #{tpu_custom_call.1} parent=1 // pred_region
      _
    $region29: #{tpu_custom_call.1} parent=1 // pred_fallthru
      _
    %v29 = vld [vmem:[%s0] sm:$0xff]
    %v30 = vld [vmem:[%s1] sm:$0xff]
    %v31 = vld [vmem:[%s1 + $0x8] sm:$0xff]
    %v32 = vld [vmem:[%s1 + $0x10] sm:$0xff]
    %v33 = vld [vmem:[%s1 + $0x18] sm:$0xff]
    %v34 = vld [vmem:[%s1 + $0x20] sm:$0xff]
    %v35 = vld [vmem:[%s1 + $0x28] sm:$0xff]
    %v36 = vld [vmem:[%s1 + $0x30] sm:$0xff]
    %v37 = vld [vmem:[%s1 + $0x38] sm:$0xff]
    %v38 = vld [vmem:[%s1 + $0x40] sm:$0xff]
    %v39 = vld [vmem:[%s1 + $0x48] sm:$0xff]
    %v40 = vld [vmem:[%s1 + $0x50] sm:$0xff]
    %v41 = vld [vmem:[%s1 + $0x58] sm:$0xff]
    %v42 = vld [vmem:[%s1 + $0x60] sm:$0xff]
    %v43 = vld [vmem:[%s1 + $0x68] sm:$0xff]
    %v44 = vld [vmem:[%s1 + $0x70] sm:$0xff]
    %v45 = vld [vmem:[%s1 + $0x78] sm:$0xff]
    %v46 = vld [vmem:[%s2] sm:$0xff]
    %v47 = vld [vmem:[%s2 + $0x8] sm:$0xff]
    %v48 = vld [vmem:[%s2 + $0x10] sm:$0xff]
    %v49 = vld [vmem:[%s2 + $0x18] sm:$0xff]
    %v50 = vld [vmem:[%s2 + $0x20] sm:$0xff]
    %v51 = vld [vmem:[%s2 + $0x28] sm:$0xff]
    %v52 = vld [vmem:[%s2 + $0x30] sm:$0xff]
    %v53 = vld [vmem:[%s2 + $0x38] sm:$0xff]
    %v54 = vld [vmem:[%s2 + $0x40] sm:$0xff]
    %v55 = vld [vmem:[%s2 + $0x48] sm:$0xff]
    %v56 = vld [vmem:[%s2 + $0x50] sm:$0xff]
    %v57 = vld [vmem:[%s2 + $0x58] sm:$0xff]
    %v58 = vld [vmem:[%s2 + $0x60] sm:$0xff]
    %v59 = vld [vmem:[%s2 + $0x68] sm:$0xff]
    %v60 = vld [vmem:[%s2 + $0x70] sm:$0xff]
    %v61 = vld [vmem:[%s2 + $0x78] sm:$0xff]
    %63 = vset.pattern.permute.xlu0 0
    %64 = vperm.xlu0 %63, %v30
    %v65 = vpop.permute.xlu0 %64
    %68 = vset.pattern.permute.xlu0 0
    %69 = vperm.xlu0 %68, %v31
    %v70 = vpop.permute.xlu0 %69
    %73 = vset.pattern.permute.xlu0 0
    %74 = vperm.xlu0 %73, %v32
    %v75 = vpop.permute.xlu0 %74
    %78 = vset.pattern.permute.xlu0 0
    %79 = vperm.xlu0 %78, %v33
    %v80 = vpop.permute.xlu0 %79
    %83 = vset.pattern.permute.xlu0 0
    %84 = vperm.xlu0 %83, %v34
    %v85 = vpop.permute.xlu0 %84
    %88 = vset.pattern.permute.xlu0 0
    %89 = vperm.xlu0 %88, %v35
    %v90 = vpop.permute.xlu0 %89
    %93 = vset.pattern.permute.xlu0 0
    %94 = vperm.xlu0 %93, %v36
    %v95 = vpop.permute.xlu0 %94
    %98 = vset.pattern.permute.xlu0 0
    %99 = vperm.xlu0 %98, %v37
    %v100 = vpop.permute.xlu0 %99
    %103 = vset.pattern.permute.xlu0 0
    %104 = vperm.xlu0 %103, %v38
    %v105 = vpop.permute.xlu0 %104
    %108 = vset.pattern.permute.xlu0 0
    %109 = vperm.xlu0 %108, %v39
    %v110 = vpop.permute.xlu0 %109
    %113 = vset.pattern.permute.xlu0 0
    %114 = vperm.xlu0 %113, %v40
    %v115 = vpop.permute.xlu0 %114
    %118 = vset.pattern.permute.xlu0 0
    %119 = vperm.xlu0 %118, %v41
    %v120 = vpop.permute.xlu0 %119
    %123 = vset.pattern.permute.xlu0 0
    %124 = vperm.xlu0 %123, %v42
    %v125 = vpop.permute.xlu0 %124
    %128 = vset.pattern.permute.xlu0 0
    %129 = vperm.xlu0 %128, %v43
    %v130 = vpop.permute.xlu0 %129
    %133 = vset.pattern.permute.xlu0 0
    %134 = vperm.xlu0 %133, %v44
    %v135 = vpop.permute.xlu0 %134
    %138 = vset.pattern.permute.xlu0 0
    %139 = vperm.xlu0 %138, %v45
    %v140 = vpop.permute.xlu0 %139
    %v142 = vlaneseq
    %v143 = vshrl.u32 %v142, 7
    %v144 = vsub.s32 0, %v143
    %v145 = vrot.slane %v29, %v144
    %v146 = vmul.f32 %v65, %v145
    %v147 = vmul.f32 %v70, %v145
    %v148 = vmul.f32 %v75, %v145
    %v149 = vmul.f32 %v80, %v145
    %v150 = vmul.f32 %v85, %v145
    %v151 = vmul.f32 %v90, %v145
    %v152 = vmul.f32 %v95, %v145
    %v153 = vmul.f32 %v100, %v145
    %v154 = vmul.f32 %v105, %v145
    %v155 = vmul.f32 %v110, %v145
    %v156 = vmul.f32 %v115, %v145
    %v157 = vmul.f32 %v120, %v145
    %v158 = vmul.f32 %v125, %v145
    %v159 = vmul.f32 %v130, %v145
    %v160 = vmul.f32 %v135, %v145
    %v161 = vmul.f32 %v140, %v145
    %163 = vset.pattern.permute.xlu0 0
    %164 = vperm.xlu0 %163, %v46
    %v165 = vpop.permute.xlu0 %164
    %168 = vset.pattern.permute.xlu0 0
    %169 = vperm.xlu0 %168, %v47
    %v170 = vpop.permute.xlu0 %169
    %173 = vset.pattern.permute.xlu0 0
    %174 = vperm.xlu0 %173, %v48
    %v175 = vpop.permute.xlu0 %174
    %178 = vset.pattern.permute.xlu0 0
    %179 = vperm.xlu0 %178, %v49
    %v180 = vpop.permute.xlu0 %179
    %183 = vset.pattern.permute.xlu0 0
    %184 = vperm.xlu0 %183, %v50
    %v185 = vpop.permute.xlu0 %184
    %188 = vset.pattern.permute.xlu0 0
    %189 = vperm.xlu0 %188, %v51
    %v190 = vpop.permute.xlu0 %189
    %193 = vset.pattern.permute.xlu0 0
    %194 = vperm.xlu0 %193, %v52
    %v195 = vpop.permute.xlu0 %194
    %198 = vset.pattern.permute.xlu0 0
    %199 = vperm.xlu0 %198, %v53
    %v200 = vpop.permute.xlu0 %199
    %203 = vset.pattern.permute.xlu0 0
    %204 = vperm.xlu0 %203, %v54
    %v205 = vpop.permute.xlu0 %204
    %208 = vset.pattern.permute.xlu0 0
    %209 = vperm.xlu0 %208, %v55
    %v210 = vpop.permute.xlu0 %209
    %213 = vset.pattern.permute.xlu0 0
    %214 = vperm.xlu0 %213, %v56
    %v215 = vpop.permute.xlu0 %214
    %218 = vset.pattern.permute.xlu0 0
    %219 = vperm.xlu0 %218, %v57
    %v220 = vpop.permute.xlu0 %219
    %223 = vset.pattern.permute.xlu0 0
    %224 = vperm.xlu0 %223, %v58
    %v225 = vpop.permute.xlu0 %224
    %228 = vset.pattern.permute.xlu0 0
    %229 = vperm.xlu0 %228, %v59
    %v230 = vpop.permute.xlu0 %229
    %233 = vset.pattern.permute.xlu0 0
    %234 = vperm.xlu0 %233, %v60
    %v235 = vpop.permute.xlu0 %234
    %238 = vset.pattern.permute.xlu0 0
    %239 = vperm.xlu0 %238, %v61
    %v240 = vpop.permute.xlu0 %239
    %v242 = vadd.f32 %v165, %v146
    %v243 = vadd.f32 %v170, %v147
    %v244 = vadd.f32 %v175, %v148
    %v245 = vadd.f32 %v180, %v149
    %v246 = vadd.f32 %v185, %v150
    %v247 = vadd.f32 %v190, %v151
    %v248 = vadd.f32 %v195, %v152
    %v249 = vadd.f32 %v200, %v153
    %v250 = vadd.f32 %v205, %v154
    %v251 = vadd.f32 %v210, %v155
    %v252 = vadd.f32 %v215, %v156
    %v253 = vadd.f32 %v220, %v157
    %v254 = vadd.f32 %v225, %v158
    %v255 = vadd.f32 %v230, %v159
    %v256 = vadd.f32 %v235, %v160
    %v257 = vadd.f32 %v240, %v161
    %258 = vset.pattern.permute.xlu0 1
    %259 = vperm.xlu0 %258, %v30
    %v260 = vpop.permute.xlu0 %259
    %262 = vset.pattern.permute.xlu0 1
    %263 = vperm.xlu0 %262, %v31
    %v264 = vpop.permute.xlu0 %263
    %266 = vset.pattern.permute.xlu0 1
    %267 = vperm.xlu0 %266, %v32
    %v268 = vpop.permute.xlu0 %267
    %270 = vset.pattern.permute.xlu0 1
    %271 = vperm.xlu0 %270, %v33
    %v272 = vpop.permute.xlu0 %271
    %274 = vset.pattern.permute.xlu0 1
    %275 = vperm.xlu0 %274, %v34
    %v276 = vpop.permute.xlu0 %275
    %278 = vset.pattern.permute.xlu0 1
    %279 = vperm.xlu0 %278, %v35
    %v280 = vpop.permute.xlu0 %279
    %282 = vset.pattern.permute.xlu0 1
    %283 = vperm.xlu0 %282, %v36
    %v284 = vpop.permute.xlu0 %283
    %286 = vset.pattern.permute.xlu0 1
    %287 = vperm.xlu0 %286, %v37
    %v288 = vpop.permute.xlu0 %287
    %290 = vset.pattern.permute.xlu0 1
    %291 = vperm.xlu0 %290, %v38
    %v292 = vpop.permute.xlu0 %291
    %294 = vset.pattern.permute.xlu0 1
    %295 = vperm.xlu0 %294, %v39
    %v296 = vpop.permute.xlu0 %295
    %298 = vset.pattern.permute.xlu0 1
    %299 = vperm.xlu0 %298, %v40
    %v300 = vpop.permute.xlu0 %299
    %302 = vset.pattern.permute.xlu0 1
    %303 = vperm.xlu0 %302, %v41
    %v304 = vpop.permute.xlu0 %303
    %306 = vset.pattern.permute.xlu0 1
    %307 = vperm.xlu0 %306, %v42
    %v308 = vpop.permute.xlu0 %307
    %310 = vset.pattern.permute.xlu0 1
    %311 = vperm.xlu0 %310, %v43
    %v312 = vpop.permute.xlu0 %311
    %314 = vset.pattern.permute.xlu0 1
    %315 = vperm.xlu0 %314, %v44
    %v316 = vpop.permute.xlu0 %315
    %318 = vset.pattern.permute.xlu0 1
    %319 = vperm.xlu0 %318, %v45
    %v320 = vpop.permute.xlu0 %319
    %v322 = vlaneseq
    %v323 = vshrl.u32 %v322, 7
    %v324 = vsub.s32 1, %v323
    %v325 = vrot.slane %v29, %v324
    %v326 = vmul.f32 %v260, %v325
    %v327 = vmul.f32 %v264, %v325
    %v328 = vmul.f32 %v268, %v325
    %v329 = vmul.f32 %v272, %v325
    %v330 = vmul.f32 %v276, %v325
    %v331 = vmul.f32 %v280, %v325
    %v332 = vmul.f32 %v284, %v325
    %v333 = vmul.f32 %v288, %v325
    %v334 = vmul.f32 %v292, %v325
    %v335 = vmul.f32 %v296, %v325
    %v336 = vmul.f32 %v300, %v325
    %v337 = vmul.f32 %v304, %v325
    %v338 = vmul.f32 %v308, %v325
    %v339 = vmul.f32 %v312, %v325
    %v340 = vmul.f32 %v316, %v325
    %v341 = vmul.f32 %v320, %v325
    %v342 = vadd.f32 %v242, %v326
    %v343 = vadd.f32 %v243, %v327
    %v344 = vadd.f32 %v244, %v328
    %v345 = vadd.f32 %v245, %v329
    %v346 = vadd.f32 %v246, %v330
    %v347 = vadd.f32 %v247, %v331
    %v348 = vadd.f32 %v248, %v332
    %v349 = vadd.f32 %v249, %v333
    %v350 = vadd.f32 %v250, %v334
    %v351 = vadd.f32 %v251, %v335
    %v352 = vadd.f32 %v252, %v336
    %v353 = vadd.f32 %v253, %v337
    %v354 = vadd.f32 %v254, %v338
    %v355 = vadd.f32 %v255, %v339
    %v356 = vadd.f32 %v256, %v340
    %v357 = vadd.f32 %v257, %v341
    %358 = vset.pattern.permute.xlu0 2
    %359 = vperm.xlu0 %358, %v30
    %v360 = vpop.permute.xlu0 %359
    %362 = vset.pattern.permute.xlu0 2
    %363 = vperm.xlu0 %362, %v31
    %v364 = vpop.permute.xlu0 %363
    %366 = vset.pattern.permute.xlu0 2
    %367 = vperm.xlu0 %366, %v32
    %v368 = vpop.permute.xlu0 %367
    %370 = vset.pattern.permute.xlu0 2
    %371 = vperm.xlu0 %370, %v33
    %v372 = vpop.permute.xlu0 %371
    %374 = vset.pattern.permute.xlu0 2
    %375 = vperm.xlu0 %374, %v34
    %v376 = vpop.permute.xlu0 %375
    %378 = vset.pattern.permute.xlu0 2
    %379 = vperm.xlu0 %378, %v35
    %v380 = vpop.permute.xlu0 %379
    %382 = vset.pattern.permute.xlu0 2
    %383 = vperm.xlu0 %382, %v36
    %v384 = vpop.permute.xlu0 %383
    %386 = vset.pattern.permute.xlu0 2
    %387 = vperm.xlu0 %386, %v37
    %v388 = vpop.permute.xlu0 %387
    %390 = vset.pattern.permute.xlu0 2
    %391 = vperm.xlu0 %390, %v38
    %v392 = vpop.permute.xlu0 %391
    %394 = vset.pattern.permute.xlu0 2
    %395 = vperm.xlu0 %394, %v39
    %v396 = vpop.permute.xlu0 %395
    %398 = vset.pattern.permute.xlu0 2
    %399 = vperm.xlu0 %398, %v40
    %v400 = vpop.permute.xlu0 %399
    %402 = vset.pattern.permute.xlu0 2
    %403 = vperm.xlu0 %402, %v41
    %v404 = vpop.permute.xlu0 %403
    %406 = vset.pattern.permute.xlu0 2
    %407 = vperm.xlu0 %406, %v42
    %v408 = vpop.permute.xlu0 %407
    %410 = vset.pattern.permute.xlu0 2
    %411 = vperm.xlu0 %410, %v43
    %v412 = vpop.permute.xlu0 %411
    %414 = vset.pattern.permute.xlu0 2
    %415 = vperm.xlu0 %414, %v44
    %v416 = vpop.permute.xlu0 %415
    %418 = vset.pattern.permute.xlu0 2
    %419 = vperm.xlu0 %418, %v45
    %v420 = vpop.permute.xlu0 %419
    %v422 = vlaneseq
    %v423 = vshrl.u32 %v422, 7
    %v424 = vsub.s32 2, %v423
    %v425 = vrot.slane %v29, %v424
    %v426 = vmul.f32 %v360, %v425
    %v427 = vmul.f32 %v364, %v425
    %v428 = vmul.f32 %v368, %v425
    %v429 = vmul.f32 %v372, %v425
    %v430 = vmul.f32 %v376, %v425
    %v431 = vmul.f32 %v380, %v425
    %v432 = vmul.f32 %v384, %v425
    %v433 = vmul.f32 %v388, %v425
    %v434 = vmul.f32 %v392, %v425
    %v435 = vmul.f32 %v396, %v425
    %v436 = vmul.f32 %v400, %v425
    %v437 = vmul.f32 %v404, %v425
    %v438 = vmul.f32 %v408, %v425
    %v439 = vmul.f32 %v412, %v425
    %v440 = vmul.f32 %v416, %v425
    %v441 = vmul.f32 %v420, %v425
    %v442 = vadd.f32 %v342, %v426
    %v443 = vadd.f32 %v343, %v427
    %v444 = vadd.f32 %v344, %v428
    %v445 = vadd.f32 %v345, %v429
    %v446 = vadd.f32 %v346, %v430
    %v447 = vadd.f32 %v347, %v431
    %v448 = vadd.f32 %v348, %v432
    %v449 = vadd.f32 %v349, %v433
    %v450 = vadd.f32 %v350, %v434
    %v451 = vadd.f32 %v351, %v435
    %v452 = vadd.f32 %v352, %v436
    %v453 = vadd.f32 %v353, %v437
    %v454 = vadd.f32 %v354, %v438
    %v455 = vadd.f32 %v355, %v439
    %v456 = vadd.f32 %v356, %v440
    %v457 = vadd.f32 %v357, %v441
    %458 = vset.pattern.permute.xlu0 3
    %459 = vperm.xlu0 %458, %v30
    %v460 = vpop.permute.xlu0 %459
    %462 = vset.pattern.permute.xlu0 3
    %463 = vperm.xlu0 %462, %v31
    %v464 = vpop.permute.xlu0 %463
    %466 = vset.pattern.permute.xlu0 3
    %467 = vperm.xlu0 %466, %v32
    %v468 = vpop.permute.xlu0 %467
    %470 = vset.pattern.permute.xlu0 3
    %471 = vperm.xlu0 %470, %v33
    %v472 = vpop.permute.xlu0 %471
    %474 = vset.pattern.permute.xlu0 3
    %475 = vperm.xlu0 %474, %v34
    %v476 = vpop.permute.xlu0 %475
    %478 = vset.pattern.permute.xlu0 3
    %479 = vperm.xlu0 %478, %v35
    %v480 = vpop.permute.xlu0 %479
    %482 = vset.pattern.permute.xlu0 3
    %483 = vperm.xlu0 %482, %v36
    %v484 = vpop.permute.xlu0 %483
    %486 = vset.pattern.permute.xlu0 3
    %487 = vperm.xlu0 %486, %v37
    %v488 = vpop.permute.xlu0 %487
    %490 = vset.pattern.permute.xlu0 3
    %491 = vperm.xlu0 %490, %v38
    %v492 = vpop.permute.xlu0 %491
    %494 = vset.pattern.permute.xlu0 3
    %495 = vperm.xlu0 %494, %v39
    %v496 = vpop.permute.xlu0 %495
    %498 = vset.pattern.permute.xlu0 3
    %499 = vperm.xlu0 %498, %v40
    %v500 = vpop.permute.xlu0 %499
    %502 = vset.pattern.permute.xlu0 3
    %503 = vperm.xlu0 %502, %v41
    %v504 = vpop.permute.xlu0 %503
    %506 = vset.pattern.permute.xlu0 3
    %507 = vperm.xlu0 %506, %v42
    %v508 = vpop.permute.xlu0 %507
    %510 = vset.pattern.permute.xlu0 3
    %511 = vperm.xlu0 %510, %v43
    %v512 = vpop.permute.xlu0 %511
    %514 = vset.pattern.permute.xlu0 3
    %515 = vperm.xlu0 %514, %v44
    %v516 = vpop.permute.xlu0 %515
    %518 = vset.pattern.permute.xlu0 3
    %519 = vperm.xlu0 %518, %v45
    %v520 = vpop.permute.xlu0 %519
    %v522 = vlaneseq
    %v523 = vshrl.u32 %v522, 7
    %v524 = vsub.s32 3, %v523
    %v525 = vrot.slane %v29, %v524
    %v526 = vmul.f32 %v460, %v525
    %v527 = vmul.f32 %v464, %v525
    %v528 = vmul.f32 %v468, %v525
    %v529 = vmul.f32 %v472, %v525
    %v530 = vmul.f32 %v476, %v525
    %v531 = vmul.f32 %v480, %v525
    %v532 = vmul.f32 %v484, %v525
    %v533 = vmul.f32 %v488, %v525
    %v534 = vmul.f32 %v492, %v525
    %v535 = vmul.f32 %v496, %v525
    %v536 = vmul.f32 %v500, %v525
    %v537 = vmul.f32 %v504, %v525
    %v538 = vmul.f32 %v508, %v525
    %v539 = vmul.f32 %v512, %v525
    %v540 = vmul.f32 %v516, %v525
    %v541 = vmul.f32 %v520, %v525
    %v542 = vadd.f32 %v442, %v526
    %v543 = vadd.f32 %v443, %v527
    %v544 = vadd.f32 %v444, %v528
    %v545 = vadd.f32 %v445, %v529
    %v546 = vadd.f32 %v446, %v530
    %v547 = vadd.f32 %v447, %v531
    %v548 = vadd.f32 %v448, %v532
    %v549 = vadd.f32 %v449, %v533
    %v550 = vadd.f32 %v450, %v534
    %v551 = vadd.f32 %v451, %v535
    %v552 = vadd.f32 %v452, %v536
    %v553 = vadd.f32 %v453, %v537
    %v554 = vadd.f32 %v454, %v538
    %v555 = vadd.f32 %v455, %v539
    %v556 = vadd.f32 %v456, %v540
    %v557 = vadd.f32 %v457, %v541
    %558 = vset.pattern.permute.xlu0 4
    %559 = vperm.xlu0 %558, %v30
    %v560 = vpop.permute.xlu0 %559
    %562 = vset.pattern.permute.xlu0 4
    %563 = vperm.xlu0 %562, %v31
    %v564 = vpop.permute.xlu0 %563
    %566 = vset.pattern.permute.xlu0 4
    %567 = vperm.xlu0 %566, %v32
    %v568 = vpop.permute.xlu0 %567
    %570 = vset.pattern.permute.xlu0 4
    %571 = vperm.xlu0 %570, %v33
    %v572 = vpop.permute.xlu0 %571
    %574 = vset.pattern.permute.xlu0 4
    %575 = vperm.xlu0 %574, %v34
    %v576 = vpop.permute.xlu0 %575
    %578 = vset.pattern.permute.xlu0 4
    %579 = vperm.xlu0 %578, %v35
    %v580 = vpop.permute.xlu0 %579
    %582 = vset.pattern.permute.xlu0 4
    %583 = vperm.xlu0 %582, %v36
    %v584 = vpop.permute.xlu0 %583
    %586 = vset.pattern.permute.xlu0 4
    %587 = vperm.xlu0 %586, %v37
    %v588 = vpop.permute.xlu0 %587
    %590 = vset.pattern.permute.xlu0 4
    %591 = vperm.xlu0 %590, %v38
    %v592 = vpop.permute.xlu0 %591
    %594 = vset.pattern.permute.xlu0 4
    %595 = vperm.xlu0 %594, %v39
    %v596 = vpop.permute.xlu0 %595
    %598 = vset.pattern.permute.xlu0 4
    %599 = vperm.xlu0 %598, %v40
    %v600 = vpop.permute.xlu0 %599
    %602 = vset.pattern.permute.xlu0 4
    %603 = vperm.xlu0 %602, %v41
    %v604 = vpop.permute.xlu0 %603
    %606 = vset.pattern.permute.xlu0 4
    %607 = vperm.xlu0 %606, %v42
    %v608 = vpop.permute.xlu0 %607
    %610 = vset.pattern.permute.xlu0 4
    %611 = vperm.xlu0 %610, %v43
    %v612 = vpop.permute.xlu0 %611
    %614 = vset.pattern.permute.xlu0 4
    %615 = vperm.xlu0 %614, %v44
    %v616 = vpop.permute.xlu0 %615
    %618 = vset.pattern.permute.xlu0 4
    %619 = vperm.xlu0 %618, %v45
    %v620 = vpop.permute.xlu0 %619
    %v622 = vlaneseq
    %v623 = vshrl.u32 %v622, 7
    %v624 = vsub.s32 4, %v623
    %v625 = vrot.slane %v29, %v624
    %v626 = vmul.f32 %v560, %v625
    %v627 = vmul.f32 %v564, %v625
    %v628 = vmul.f32 %v568, %v625
    %v629 = vmul.f32 %v572, %v625
    %v630 = vmul.f32 %v576, %v625
    %v631 = vmul.f32 %v580, %v625
    %v632 = vmul.f32 %v584, %v625
    %v633 = vmul.f32 %v588, %v625
    %v634 = vmul.f32 %v592, %v625
    %v635 = vmul.f32 %v596, %v625
    %v636 = vmul.f32 %v600, %v625
    %v637 = vmul.f32 %v604, %v625
    %v638 = vmul.f32 %v608, %v625
    %v639 = vmul.f32 %v612, %v625
    %v640 = vmul.f32 %v616, %v625
    %v641 = vmul.f32 %v620, %v625
    %v642 = vadd.f32 %v542, %v626
    %v643 = vadd.f32 %v543, %v627
    %v644 = vadd.f32 %v544, %v628
    %v645 = vadd.f32 %v545, %v629
    %v646 = vadd.f32 %v546, %v630
    %v647 = vadd.f32 %v547, %v631
    %v648 = vadd.f32 %v548, %v632
    %v649 = vadd.f32 %v549, %v633
    %v650 = vadd.f32 %v550, %v634
    %v651 = vadd.f32 %v551, %v635
    %v652 = vadd.f32 %v552, %v636
    %v653 = vadd.f32 %v553, %v637
    %v654 = vadd.f32 %v554, %v638
    %v655 = vadd.f32 %v555, %v639
    %v656 = vadd.f32 %v556, %v640
    %v657 = vadd.f32 %v557, %v641
    %658 = vset.pattern.permute.xlu0 5
    %659 = vperm.xlu0 %658, %v30
    %v660 = vpop.permute.xlu0 %659
    %662 = vset.pattern.permute.xlu0 5
    %663 = vperm.xlu0 %662, %v31
    %v664 = vpop.permute.xlu0 %663
    %666 = vset.pattern.permute.xlu0 5
    %667 = vperm.xlu0 %666, %v32
    %v668 = vpop.permute.xlu0 %667
    %670 = vset.pattern.permute.xlu0 5
    %671 = vperm.xlu0 %670, %v33
    %v672 = vpop.permute.xlu0 %671
    %674 = vset.pattern.permute.xlu0 5
    %675 = vperm.xlu0 %674, %v34
    %v676 = vpop.permute.xlu0 %675
    %678 = vset.pattern.permute.xlu0 5
    %679 = vperm.xlu0 %678, %v35
    %v680 = vpop.permute.xlu0 %679
    %682 = vset.pattern.permute.xlu0 5
    %683 = vperm.xlu0 %682, %v36
    %v684 = vpop.permute.xlu0 %683
    %686 = vset.pattern.permute.xlu0 5
    %687 = vperm.xlu0 %686, %v37
    %v688 = vpop.permute.xlu0 %687
    %690 = vset.pattern.permute.xlu0 5
    %691 = vperm.xlu0 %690, %v38
    %v692 = vpop.permute.xlu0 %691
    %694 = vset.pattern.permute.xlu0 5
    %695 = vperm.xlu0 %694, %v39
    %v696 = vpop.permute.xlu0 %695
    %698 = vset.pattern.permute.xlu0 5
    %699 = vperm.xlu0 %698, %v40
    %v700 = vpop.permute.xlu0 %699
    %702 = vset.pattern.permute.xlu0 5
    %703 = vperm.xlu0 %702, %v41
    %v704 = vpop.permute.xlu0 %703
    %706 = vset.pattern.permute.xlu0 5
    %707 = vperm.xlu0 %706, %v42
    %v708 = vpop.permute.xlu0 %707
    %710 = vset.pattern.permute.xlu0 5
    %711 = vperm.xlu0 %710, %v43
    %v712 = vpop.permute.xlu0 %711
    %714 = vset.pattern.permute.xlu0 5
    %715 = vperm.xlu0 %714, %v44
    %v716 = vpop.permute.xlu0 %715
    %718 = vset.pattern.permute.xlu0 5
    %719 = vperm.xlu0 %718, %v45
    %v720 = vpop.permute.xlu0 %719
    %v722 = vlaneseq
    %v723 = vshrl.u32 %v722, 7
    %v724 = vsub.s32 5, %v723
    %v725 = vrot.slane %v29, %v724
    %v726 = vmul.f32 %v660, %v725
    %v727 = vmul.f32 %v664, %v725
    %v728 = vmul.f32 %v668, %v725
    %v729 = vmul.f32 %v672, %v725
    %v730 = vmul.f32 %v676, %v725
    %v731 = vmul.f32 %v680, %v725
    %v732 = vmul.f32 %v684, %v725
    %v733 = vmul.f32 %v688, %v725
    %v734 = vmul.f32 %v692, %v725
    %v735 = vmul.f32 %v696, %v725
    %v736 = vmul.f32 %v700, %v725
    %v737 = vmul.f32 %v704, %v725
    %v738 = vmul.f32 %v708, %v725
    %v739 = vmul.f32 %v712, %v725
    %v740 = vmul.f32 %v716, %v725
    %v741 = vmul.f32 %v720, %v725
    %v742 = vadd.f32 %v642, %v726
    %v743 = vadd.f32 %v643, %v727
    %v744 = vadd.f32 %v644, %v728
    %v745 = vadd.f32 %v645, %v729
    %v746 = vadd.f32 %v646, %v730
    %v747 = vadd.f32 %v647, %v731
    %v748 = vadd.f32 %v648, %v732
    %v749 = vadd.f32 %v649, %v733
    %v750 = vadd.f32 %v650, %v734
    %v751 = vadd.f32 %v651, %v735
    %v752 = vadd.f32 %v652, %v736
    %v753 = vadd.f32 %v653, %v737
    %v754 = vadd.f32 %v654, %v738
    %v755 = vadd.f32 %v655, %v739
    %v756 = vadd.f32 %v656, %v740
    %v757 = vadd.f32 %v657, %v741
    %758 = vset.pattern.permute.xlu0 6
    %759 = vperm.xlu0 %758, %v30
    %v760 = vpop.permute.xlu0 %759
    %762 = vset.pattern.permute.xlu0 6
    %763 = vperm.xlu0 %762, %v31
    %v764 = vpop.permute.xlu0 %763
    %766 = vset.pattern.permute.xlu0 6
    %767 = vperm.xlu0 %766, %v32
    %v768 = vpop.permute.xlu0 %767
    %770 = vset.pattern.permute.xlu0 6
    %771 = vperm.xlu0 %770, %v33
    %v772 = vpop.permute.xlu0 %771
    %774 = vset.pattern.permute.xlu0 6
    %775 = vperm.xlu0 %774, %v34
    %v776 = vpop.permute.xlu0 %775
    %778 = vset.pattern.permute.xlu0 6
    %779 = vperm.xlu0 %778, %v35
    %v780 = vpop.permute.xlu0 %779
    %782 = vset.pattern.permute.xlu0 6
    %783 = vperm.xlu0 %782, %v36
    %v784 = vpop.permute.xlu0 %783
    %786 = vset.pattern.permute.xlu0 6
    %787 = vperm.xlu0 %786, %v37
    %v788 = vpop.permute.xlu0 %787
    %790 = vset.pattern.permute.xlu0 6
    %791 = vperm.xlu0 %790, %v38
    %v792 = vpop.permute.xlu0 %791
    %794 = vset.pattern.permute.xlu0 6
    %795 = vperm.xlu0 %794, %v39
    %v796 = vpop.permute.xlu0 %795
    %798 = vset.pattern.permute.xlu0 6
    %799 = vperm.xlu0 %798, %v40
    %v800 = vpop.permute.xlu0 %799
    %802 = vset.pattern.permute.xlu0 6
    %803 = vperm.xlu0 %802, %v41
    %v804 = vpop.permute.xlu0 %803
    %806 = vset.pattern.permute.xlu0 6
    %807 = vperm.xlu0 %806, %v42
    %v808 = vpop.permute.xlu0 %807
    %810 = vset.pattern.permute.xlu0 6
    %811 = vperm.xlu0 %810, %v43
    %v812 = vpop.permute.xlu0 %811
    %814 = vset.pattern.permute.xlu0 6
    %815 = vperm.xlu0 %814, %v44
    %v816 = vpop.permute.xlu0 %815
    %818 = vset.pattern.permute.xlu0 6
    %819 = vperm.xlu0 %818, %v45
    %v820 = vpop.permute.xlu0 %819
    %v822 = vlaneseq
    %v823 = vshrl.u32 %v822, 7
    %v824 = vsub.s32 6, %v823
    %v825 = vrot.slane %v29, %v824
    %v826 = vmul.f32 %v760, %v825
    %v827 = vmul.f32 %v764, %v825
    %v828 = vmul.f32 %v768, %v825
    %v829 = vmul.f32 %v772, %v825
    %v830 = vmul.f32 %v776, %v825
    %v831 = vmul.f32 %v780, %v825
    %v832 = vmul.f32 %v784, %v825
    %v833 = vmul.f32 %v788, %v825
    %v834 = vmul.f32 %v792, %v825
    %v835 = vmul.f32 %v796, %v825
    %v836 = vmul.f32 %v800, %v825
    %v837 = vmul.f32 %v804, %v825
    %v838 = vmul.f32 %v808, %v825
    %v839 = vmul.f32 %v812, %v825
    %v840 = vmul.f32 %v816, %v825
    %v841 = vmul.f32 %v820, %v825
    %v842 = vadd.f32 %v742, %v826
    %v843 = vadd.f32 %v743, %v827
    %v844 = vadd.f32 %v744, %v828
    %v845 = vadd.f32 %v745, %v829
    %v846 = vadd.f32 %v746, %v830
    %v847 = vadd.f32 %v747, %v831
    %v848 = vadd.f32 %v748, %v832
    %v849 = vadd.f32 %v749, %v833
    %v850 = vadd.f32 %v750, %v834
    %v851 = vadd.f32 %v751, %v835
    %v852 = vadd.f32 %v752, %v836
    %v853 = vadd.f32 %v753, %v837
    %v854 = vadd.f32 %v754, %v838
    %v855 = vadd.f32 %v755, %v839
    %v856 = vadd.f32 %v756, %v840
    %v857 = vadd.f32 %v757, %v841
    %v858 = vmax.f32 %v842, 0.0
    %v859 = vmax.f32 %v843, 0.0
    %v860 = vmax.f32 %v844, 0.0
    %v861 = vmax.f32 %v845, 0.0
    %v862 = vmax.f32 %v846, 0.0
    %v863 = vmax.f32 %v847, 0.0
    %v864 = vmax.f32 %v848, 0.0
    %v865 = vmax.f32 %v849, 0.0
    %v866 = vmax.f32 %v850, 0.0
    %v867 = vmax.f32 %v851, 0.0
    %v868 = vmax.f32 %v852, 0.0
    %v869 = vmax.f32 %v853, 0.0
    %v870 = vmax.f32 %v854, 0.0
    %v871 = vmax.f32 %v855, 0.0
    %v872 = vmax.f32 %v856, 0.0
    %v873 = vmax.f32 %v857, 0.0
    %v874 = vld [vmem:[%s3] sm:$0xf]
    %v875 = vld [vmem:[%s3 + $0x4] sm:$0xf]
    %v876 = vld [vmem:[%s3 + $0x8] sm:$0xf]
    %v877 = vld [vmem:[%s3 + $0xc] sm:$0xf]
    %v878 = vld [vmem:[%s3 + $0x10] sm:$0xf]
    %v879 = vld [vmem:[%s3 + $0x14] sm:$0xf]
    %v880 = vld [vmem:[%s3 + $0x18] sm:$0xf]
    %v881 = vld [vmem:[%s3 + $0x1c] sm:$0xf]
    %v882 = vld [vmem:[%s3 + $0x20] sm:$0xf]
    %v883 = vld [vmem:[%s3 + $0x24] sm:$0xf]
    %v884 = vld [vmem:[%s3 + $0x28] sm:$0xf]
    %v885 = vld [vmem:[%s3 + $0x2c] sm:$0xf]
    %v886 = vld [vmem:[%s3 + $0x30] sm:$0xf]
    %v887 = vld [vmem:[%s3 + $0x34] sm:$0xf]
    %v888 = vld [vmem:[%s3 + $0x38] sm:$0xf]
    %v889 = vld [vmem:[%s3 + $0x3c] sm:$0xf]
    %v890 = vpack.c.bf16 %v859, %v858
    %v891 = vpack.c.bf16 %v861, %v860
    %v892 = vpack.c.bf16 %v863, %v862
    %v893 = vpack.c.bf16 %v865, %v864
    %v894 = vpack.c.bf16 %v867, %v866
    %v895 = vpack.c.bf16 %v869, %v868
    %v896 = vpack.c.bf16 %v871, %v870
    %v897 = vpack.c.bf16 %v873, %v872
    %v898 = vld [vmem:[%s4] sm:$0xff]
    %v899 = vld [vmem:[%s4 + $0x8] sm:$0xff]
    %v900 = vld [vmem:[%s4 + $0x10] sm:$0xff]
    %v901 = vld [vmem:[%s4 + $0x18] sm:$0xff]
    %v902 = vld [vmem:[%s4 + $0x20] sm:$0xff]
    %v903 = vld [vmem:[%s4 + $0x28] sm:$0xff]
    %v904 = vld [vmem:[%s4 + $0x30] sm:$0xff]
    %v905 = vld [vmem:[%s4 + $0x38] sm:$0xff]
    %v906 = vld [vmem:[%s4 + $0x40] sm:$0xff]
    %v907 = vld [vmem:[%s4 + $0x48] sm:$0xff]
    %v908 = vld [vmem:[%s4 + $0x50] sm:$0xff]
    %v909 = vld [vmem:[%s4 + $0x58] sm:$0xff]
    %v910 = vld [vmem:[%s4 + $0x60] sm:$0xff]
    %v911 = vld [vmem:[%s4 + $0x68] sm:$0xff]
    %v912 = vld [vmem:[%s4 + $0x70] sm:$0xff]
    %v913 = vld [vmem:[%s4 + $0x78] sm:$0xff]
    %915 = vset.pattern.permute.xlu0 0
    %916 = vperm.xlu0 %915, %v898
    %v917 = vpop.permute.xlu0 %916
    %920 = vset.pattern.permute.xlu0 0
    %921 = vperm.xlu0 %920, %v899
    %v922 = vpop.permute.xlu0 %921
    %925 = vset.pattern.permute.xlu0 0
    %926 = vperm.xlu0 %925, %v900
    %v927 = vpop.permute.xlu0 %926
    %930 = vset.pattern.permute.xlu0 0
    %931 = vperm.xlu0 %930, %v901
    %v932 = vpop.permute.xlu0 %931
    %935 = vset.pattern.permute.xlu0 0
    %936 = vperm.xlu0 %935, %v902
    %v937 = vpop.permute.xlu0 %936
    %940 = vset.pattern.permute.xlu0 0
    %941 = vperm.xlu0 %940, %v903
    %v942 = vpop.permute.xlu0 %941
    %945 = vset.pattern.permute.xlu0 0
    %946 = vperm.xlu0 %945, %v904
    %v947 = vpop.permute.xlu0 %946
    %950 = vset.pattern.permute.xlu0 0
    %951 = vperm.xlu0 %950, %v905
    %v952 = vpop.permute.xlu0 %951
    %955 = vset.pattern.permute.xlu0 0
    %956 = vperm.xlu0 %955, %v906
    %v957 = vpop.permute.xlu0 %956
    %960 = vset.pattern.permute.xlu0 0
    %961 = vperm.xlu0 %960, %v907
    %v962 = vpop.permute.xlu0 %961
    %965 = vset.pattern.permute.xlu0 0
    %966 = vperm.xlu0 %965, %v908
    %v967 = vpop.permute.xlu0 %966
    %970 = vset.pattern.permute.xlu0 0
    %971 = vperm.xlu0 %970, %v909
    %v972 = vpop.permute.xlu0 %971
    %975 = vset.pattern.permute.xlu0 0
    %976 = vperm.xlu0 %975, %v910
    %v977 = vpop.permute.xlu0 %976
    %980 = vset.pattern.permute.xlu0 0
    %981 = vperm.xlu0 %980, %v911
    %v982 = vpop.permute.xlu0 %981
    %985 = vset.pattern.permute.xlu0 0
    %986 = vperm.xlu0 %985, %v912
    %v987 = vpop.permute.xlu0 %986
    %990 = vset.pattern.permute.xlu0 0
    %991 = vperm.xlu0 %990, %v913
    %v992 = vpop.permute.xlu0 %991
    %v1010 = vunpack.c.l.b16 %v874
    %v1011 = vunpack.c.l.b16 %v875
    %v1012 = vunpack.c.l.b16 %v876
    %v1013 = vunpack.c.l.b16 %v877
    %v1014 = vunpack.c.l.b16 %v878
    %v1015 = vunpack.c.l.b16 %v879
    %v1016 = vunpack.c.l.b16 %v880
    %v1017 = vunpack.c.l.b16 %v881
    %v1018 = vunpack.c.l.b16 %v882
    %v1019 = vunpack.c.l.b16 %v883
    %v1020 = vunpack.c.l.b16 %v884
    %v1021 = vunpack.c.l.b16 %v885
    %v1022 = vunpack.c.l.b16 %v886
    %v1023 = vunpack.c.l.b16 %v887
    %v1024 = vunpack.c.l.b16 %v888
    %v1025 = vunpack.c.l.b16 %v889
    %v1026 = vpack.c.b16 %v1011, %v1010
    %v1027 = vpack.c.b16 %v1013, %v1012
    %v1028 = vpack.c.b16 %v1015, %v1014
    %v1029 = vpack.c.b16 %v1017, %v1016
    %v1030 = vpack.c.b16 %v1019, %v1018
    %v1031 = vpack.c.b16 %v1021, %v1020
    %v1032 = vpack.c.b16 %v1023, %v1022
    %v1033 = vpack.c.b16 %v1025, %v1024
    %1042 = vmatprep.subr.bf16.mxu0 0
    %1043 = vmatpush1.bf16.msra.mxu0 %v890
    %1044 = vmatprep.subr.bf16.mxu0 0
    %1045 = vmatpush1.bf16.msra.mxu0 %v891
    %1046 = vmatprep.subr.bf16.mxu0 0
    %1047 = vmatpush1.bf16.msra.mxu0 %v892
    %1048 = vmatprep.subr.bf16.mxu0 0
    %1049 = vmatpush1.bf16.msra.mxu0 %v893
    %1050 = vmatprep.subr.bf16.mxu0 0
    %1051 = vmatpush1.bf16.msra.mxu0 %v894
    %1052 = vmatprep.subr.bf16.mxu0 0
    %1053 = vmatpush1.bf16.msra.mxu0 %v895
    %1054 = vmatprep.subr.bf16.mxu0 0
    %1055 = vmatpush1.bf16.msra.mxu0 %v896
    %1056 = vmatprep.subr.bf16.mxu0 0
    %1057 = vmatpush1.bf16.msra.mxu0 %v897
    %1058 = vmatprep.subr.bf16.mxu0 0
    %1059 = vmatpush1.bf16.msra.mxu0 0
    %1060 = vmatprep.subr.bf16.mxu0 0
    %1061 = vmatpush1.bf16.msra.mxu0 0
    %1062 = vmatprep.subr.bf16.mxu0 0
    %1063 = vmatpush1.bf16.msra.mxu0 0
    %1064 = vmatprep.subr.bf16.mxu0 0
    %1065 = vmatpush1.bf16.msra.mxu0 0
    %1066 = vmatprep.subr.bf16.mxu0 0
    %1067 = vmatpush1.bf16.msra.mxu0 0
    %1068 = vmatprep.subr.bf16.mxu0 0
    %1069 = vmatpush1.bf16.msra.mxu0 0
    %1070 = vmatprep.subr.bf16.mxu0 0
    %1071 = vmatpush1.bf16.msra.mxu0 0
    %1072 = vmatprep.subr.bf16.mxu0 0
    %1073 = vmatpush1.bf16.msra.mxu0 0
    %1074 = vmatprep.mubr.bf16.mxu0 0
    %1075 = vmatmul.mubr.bf16.gmra.mrb[0].mxu0 %v1026
    %v1076 = vpop.f32.mrb[0].mxu0
    %v1077 = vadd.f32 %v917, %v1076
    %v1078 = vpop.f32.mrb[0].mxu0
    %v1079 = vpop.f32.mrb[0].mxu0
    %v1080 = vadd.f32 %v922, %v1079
    %v1081 = vpop.f32.mrb[0].mxu0
    %1082 = vmatprep.mubr.bf16.mxu0 0
    %1083 = vmatmul.mubr.bf16.gmra.mrb[0].mxu0 %v1027
    %v1084 = vpop.f32.mrb[0].mxu0
    %v1085 = vadd.f32 %v927, %v1084
    %v1086 = vpop.f32.mrb[0].mxu0
    %v1087 = vpop.f32.mrb[0].mxu0
    %v1088 = vadd.f32 %v932, %v1087
    %v1089 = vpop.f32.mrb[0].mxu0
    %1090 = vmatprep.mubr.bf16.mxu0 0
    %1091 = vmatmul.mubr.bf16.gmra.mrb[0].mxu0 %v1028
    %v1092 = vpop.f32.mrb[0].mxu0
    %v1093 = vadd.f32 %v937, %v1092
    %v1094 = vpop.f32.mrb[0].mxu0
    %v1095 = vpop.f32.mrb[0].mxu0
    %v1096 = vadd.f32 %v942, %v1095
    %v1097 = vpop.f32.mrb[0].mxu0
    %1098 = vmatprep.mubr.bf16.mxu0 0
    %1099 = vmatmul.mubr.bf16.gmra.mrb[0].mxu0 %v1029
    %v1100 = vpop.f32.mrb[0].mxu0
    %v1101 = vadd.f32 %v947, %v1100
    %v1102 = vpop.f32.mrb[0].mxu0
    %v1103 = vpop.f32.mrb[0].mxu0
    %v1104 = vadd.f32 %v952, %v1103
    %v1105 = vpop.f32.mrb[0].mxu0
    %1106 = vmatprep.mubr.bf16.mxu0 0
    %1107 = vmatmul.mubr.bf16.gmra.mrb[0].mxu0 %v1030
    %v1108 = vpop.f32.mrb[0].mxu0
    %v1109 = vadd.f32 %v957, %v1108
    %v1110 = vpop.f32.mrb[0].mxu0
    %v1111 = vpop.f32.mrb[0].mxu0
    %v1112 = vadd.f32 %v962, %v1111
    %v1113 = vpop.f32.mrb[0].mxu0
    %1114 = vmatprep.mubr.bf16.mxu0 0
    %1115 = vmatmul.mubr.bf16.gmra.mrb[0].mxu0 %v1031
    %v1116 = vpop.f32.mrb[0].mxu0
    %v1117 = vadd.f32 %v967, %v1116
    %v1118 = vpop.f32.mrb[0].mxu0
    %v1119 = vpop.f32.mrb[0].mxu0
    %v1120 = vadd.f32 %v972, %v1119
    %v1121 = vpop.f32.mrb[0].mxu0
    %1122 = vmatprep.mubr.bf16.mxu0 0
    %1123 = vmatmul.mubr.bf16.gmra.mrb[0].mxu0 %v1032
    %v1124 = vpop.f32.mrb[0].mxu0
    %v1125 = vadd.f32 %v977, %v1124
    %v1126 = vpop.f32.mrb[0].mxu0
    %v1127 = vpop.f32.mrb[0].mxu0
    %v1128 = vadd.f32 %v982, %v1127
    %v1129 = vpop.f32.mrb[0].mxu0
    %1130 = vmatprep.mubr.bf16.mxu0 0
    %1131 = vmatmul.mubr.bf16.gmra.mrb[0].mxu0 %v1033
    %v1132 = vpop.f32.mrb[0].mxu0
    %v1133 = vadd.f32 %v987, %v1132
    %v1134 = vpop.f32.mrb[0].mxu0
    %v1135 = vpop.f32.mrb[0].mxu0
    %v1136 = vadd.f32 %v992, %v1135
    %v1137 = vpop.f32.mrb[0].mxu0
    %1138 = vdwg.mxu0
    %v1139 = vmax.f32 %v1077, 0.0
    %v1140 = vmax.f32 %v1080, 0.0
    %v1141 = vmax.f32 %v1085, 0.0
    %v1142 = vmax.f32 %v1088, 0.0
    %v1143 = vmax.f32 %v1093, 0.0
    %v1144 = vmax.f32 %v1096, 0.0
    %v1145 = vmax.f32 %v1101, 0.0
    %v1146 = vmax.f32 %v1104, 0.0
    %v1147 = vmax.f32 %v1109, 0.0
    %v1148 = vmax.f32 %v1112, 0.0
    %v1149 = vmax.f32 %v1117, 0.0
    %v1150 = vmax.f32 %v1120, 0.0
    %v1151 = vmax.f32 %v1125, 0.0
    %v1152 = vmax.f32 %v1128, 0.0
    %v1153 = vmax.f32 %v1133, 0.0
    %v1154 = vmax.f32 %v1136, 0.0
    %v1155 = vld [vmem:[%s5] sm:$0xff]
    %v1156 = vld [vmem:[%s5 + $0x8] sm:$0xff]
    %v1157 = vld [vmem:[%s5 + $0x10] sm:$0xff]
    %v1158 = vld [vmem:[%s5 + $0x18] sm:$0xff]
    %v1159 = vld [vmem:[%s5 + $0x20] sm:$0xff]
    %v1160 = vld [vmem:[%s5 + $0x28] sm:$0xff]
    %v1161 = vld [vmem:[%s5 + $0x30] sm:$0xff]
    %v1162 = vld [vmem:[%s5 + $0x38] sm:$0xff]
    %v1163 = vld [vmem:[%s5 + $0x40] sm:$0xff]
    %v1164 = vld [vmem:[%s5 + $0x48] sm:$0xff]
    %v1165 = vld [vmem:[%s5 + $0x50] sm:$0xff]
    %v1166 = vld [vmem:[%s5 + $0x58] sm:$0xff]
    %v1167 = vld [vmem:[%s5 + $0x60] sm:$0xff]
    %v1168 = vld [vmem:[%s5 + $0x68] sm:$0xff]
    %v1169 = vld [vmem:[%s5 + $0x70] sm:$0xff]
    %v1170 = vld [vmem:[%s5 + $0x78] sm:$0xff]
    %1172 = vset.pattern.permute.xlu0 0
    %1173 = vperm.xlu0 %1172, %v1155
    %v1174 = vpop.permute.xlu0 %1173
    %1177 = vset.pattern.permute.xlu0 0
    %1178 = vperm.xlu0 %1177, %v1156
    %v1179 = vpop.permute.xlu0 %1178
    %1182 = vset.pattern.permute.xlu0 0
    %1183 = vperm.xlu0 %1182, %v1157
    %v1184 = vpop.permute.xlu0 %1183
    %1187 = vset.pattern.permute.xlu0 0
    %1188 = vperm.xlu0 %1187, %v1158
    %v1189 = vpop.permute.xlu0 %1188
    %1192 = vset.pattern.permute.xlu0 0
    %1193 = vperm.xlu0 %1192, %v1159
    %v1194 = vpop.permute.xlu0 %1193
    %1197 = vset.pattern.permute.xlu0 0
    %1198 = vperm.xlu0 %1197, %v1160
    %v1199 = vpop.permute.xlu0 %1198
    %1202 = vset.pattern.permute.xlu0 0
    %1203 = vperm.xlu0 %1202, %v1161
    %v1204 = vpop.permute.xlu0 %1203
    %1207 = vset.pattern.permute.xlu0 0
    %1208 = vperm.xlu0 %1207, %v1162
    %v1209 = vpop.permute.xlu0 %1208
    %1212 = vset.pattern.permute.xlu0 0
    %1213 = vperm.xlu0 %1212, %v1163
    %v1214 = vpop.permute.xlu0 %1213
    %1217 = vset.pattern.permute.xlu0 0
    %1218 = vperm.xlu0 %1217, %v1164
    %v1219 = vpop.permute.xlu0 %1218
    %1222 = vset.pattern.permute.xlu0 0
    %1223 = vperm.xlu0 %1222, %v1165
    %v1224 = vpop.permute.xlu0 %1223
    %1227 = vset.pattern.permute.xlu0 0
    %1228 = vperm.xlu0 %1227, %v1166
    %v1229 = vpop.permute.xlu0 %1228
    %1232 = vset.pattern.permute.xlu0 0
    %1233 = vperm.xlu0 %1232, %v1167
    %v1234 = vpop.permute.xlu0 %1233
    %1237 = vset.pattern.permute.xlu0 0
    %1238 = vperm.xlu0 %1237, %v1168
    %v1239 = vpop.permute.xlu0 %1238
    %1242 = vset.pattern.permute.xlu0 0
    %1243 = vperm.xlu0 %1242, %v1169
    %v1244 = vpop.permute.xlu0 %1243
    %1247 = vset.pattern.permute.xlu0 0
    %1248 = vperm.xlu0 %1247, %v1170
    %v1249 = vpop.permute.xlu0 %1248
    %v1251 = vmul.f32 %v1139, %v1174
    %v1252 = vmul.f32 %v1140, %v1179
    %v1253 = vmul.f32 %v1141, %v1184
    %v1254 = vmul.f32 %v1142, %v1189
    %v1255 = vmul.f32 %v1143, %v1194
    %v1256 = vmul.f32 %v1144, %v1199
    %v1257 = vmul.f32 %v1145, %v1204
    %v1258 = vmul.f32 %v1146, %v1209
    %v1259 = vmul.f32 %v1147, %v1214
    %v1260 = vmul.f32 %v1148, %v1219
    %v1261 = vmul.f32 %v1149, %v1224
    %v1262 = vmul.f32 %v1150, %v1229
    %v1263 = vmul.f32 %v1151, %v1234
    %v1264 = vmul.f32 %v1152, %v1239
    %v1265 = vmul.f32 %v1153, %v1244
    %v1266 = vmul.f32 %v1154, %v1249
    %v1267 = vadd.f32 %v1251, %v1252
    %v1268 = vadd.f32 %v1267, %v1253
    %v1269 = vadd.f32 %v1268, %v1254
    %v1270 = vadd.f32 %v1269, %v1255
    %v1271 = vadd.f32 %v1270, %v1256
    %v1272 = vadd.f32 %v1271, %v1257
    %v1273 = vadd.f32 %v1272, %v1258
    %v1274 = vadd.f32 %v1273, %v1259
    %v1275 = vadd.f32 %v1274, %v1260
    %v1276 = vadd.f32 %v1275, %v1261
    %v1277 = vadd.f32 %v1276, %v1262
    %v1278 = vadd.f32 %v1277, %v1263
    %v1279 = vadd.f32 %v1278, %v1264
    %v1280 = vadd.f32 %v1279, %v1265
    %v1281 = vadd.f32 %v1280, %v1266
    %v1282 = vrot.slane %v1281, 4
    %v1283 = vadd.f32 %v1281, %v1282
    %v1284 = vrot.slane %v1283, 2
    %v1285 = vadd.f32 %v1283, %v1284
    %v1286 = vrot.slane %v1285, 1
    %v1287 = vadd.f32 %v1285, %v1286
    %s1288 = sld [smem:[#allocation2]]
    %v1289 = vstv %s1288
    %v1290 = vadd.f32 %v1287, %v1289
    %1291 = vst [vmem:[#allocation3] sm:$0x1] %v1290
    // Predicated region
    $region30: #{tpu_custom_call.1} parent=1 // pred_check
      _
    $region31: #{tpu_custom_call.1} parent=1 // pred_check_branch
      %1293 = sbr.rel (0) target = $region33
    $region32: #{tpu_custom_call.1} parent=1 // pred_region
      %s1295 = ssub.s32 16, 16
      %1296 = vsyncadd [#allocation4], %s1295
      %s1298 = sshll.u32 [#allocation3], 4
      %s1299 = int_to_ptr.vmem [resolvable:$true] %s1298
      %1301 = dma.vmem_to_hbm [thread:$0]  %s1299, 16, %s7, [#allocation4]
    $region33: #{tpu_custom_call.1} parent=1 // pred_fallthru
      _
    // Predicated region
    $region34: #{tpu_custom_call.1} parent=1 // pred_check
      _
    $region35: #{tpu_custom_call.1} parent=1 // pred_check_branch
      %1303 = sbr.rel (0) target = $region37
    $region36: #{tpu_custom_call.1} parent=1 // pred_region
      %1304 = dma.done [#allocation4], 16
    $region37: #{tpu_custom_call.1} parent=1 // pred_fallthru
      _
    %1305 = vsyncpa [#allocation4], 1

</llo_original>
